<compile_context>
chip_gen: v7x
topology: tpu7x:2x2x1
jax: 0.10.0
libtpu: 0.0.40
codegen_flags: <defaults>
</compile_context>

<pallas_src>
import jax
import jax.numpy as jnp
from jax.experimental import pallas as pl
from jax.experimental.pallas import tpu as pltpu


def make_rnn_recurrence_kernel(chunk):
    """Kernel processing `chunk` timesteps per grid step.

    Refs:
      g_ref     : (chunk, B, H)  precomputed gates  x_t @ W_ih + b
      whh_ref   : (H, H)         recurrent weight (resident across grid)
      h_out_ref : (chunk, B, H)  hidden states for this chunk
      h_ref     : (B, H) VMEM scratch -- hidden state carried across grid steps
    """

    def kernel(g_ref, whh_ref, h_out_ref, h_ref):
        # h_0 = 0 (PyTorch nn.RNN default) on the very first chunk.
        @pl.when(pl.program_id(0) == 0)
        def _():
            h_ref[...] = jnp.zeros_like(h_ref)

        h = h_ref[...]                                   # (B, H) f32
        w_hh = whh_ref[...]                              # (H, H)
        # Static inner loop over the chunk (chunk is small & compile-time).
        for i in range(chunk):
            h = jnp.tanh(
                g_ref[i]
                + jnp.dot(h, w_hh, preferred_element_type=jnp.float32)
            )
            h_out_ref[i] = h.astype(h_out_ref.dtype)
        h_ref[...] = h                                   # carry to next chunk

    return kernel


def rnn_forward(text, params, *, chunk=8):
    """text: int32 (B, T) token ids. Returns float32 logits (B, T, V)."""
    emb = params["embedding"]
    w_ih, w_hh, b = params["w_ih"], params["w_hh"], params["b"]
    w_fc, b_fc = params["w_fc"], params["b_fc"]

    B, T = text.shape
    E = emb.shape[1]
    H = w_hh.shape[0]
    V = w_fc.shape[1]

    # Embedding gather directly in time-major layout (T, B, E): only the tiny
    # (B, T) int32 id tensor is transposed, never the activation tensor.
    x_tm = jnp.take(emb, text.T, axis=0)                          # (T, B, E)

    # Hoisted input projection: one large matmul instead of T tiny ones.
    gates = (x_tm.reshape(T * B, E) @ w_ih + b).reshape(T, B, H)  # (T, B, H)

    # Chunk the time axis; pad (trailing timesteps are discarded, and the
    # forward recurrence means padding at the end cannot affect kept outputs).
    chunk = max(1, min(chunk, T))
    n_chunks = pl.cdiv(T, chunk)
    t_pad = n_chunks * chunk
    if t_pad != T:
        gates = jnp.pad(gates, ((0, t_pad - T), (0, 0), (0, 0)))

    hs = pl.pallas_call(
        make_rnn_recurrence_kernel(chunk),
        out_shape=jax.ShapeDtypeStruct((t_pad, B, H), jnp.float32),
        grid_spec=pltpu.PrefetchScalarGridSpec(
            num_scalar_prefetch=0,
            grid=(n_chunks,),
            in_specs=[
                pl.BlockSpec((chunk, B, H), lambda c: (c, 0, 0)),  # gates chunk
                pl.BlockSpec((H, H), lambda c: (0, 0)),            # W_hh (resident)
            ],
            out_specs=pl.BlockSpec((chunk, B, H), lambda c: (c, 0, 0)),
            scratch_shapes=[pltpu.VMEM((B, H), jnp.float32)],      # hidden carry
        ),
        compiler_params=pltpu.CompilerParams(
            dimension_semantics=("arbitrary",),                    # sequential time
        ),
    )(gates, w_hh)

    hs = hs[:T]                                                    # (T, B, H)

    # Hoisted fc head: one large matmul, output emitted batch-first directly.
    logits = jnp.einsum("tbh,hv->btv", hs, w_fc) + b_fc            # (B, T, V)
    return logits


def init_params(key, vocab_size, embed_dim, hidden_dim):
    k1, k2, k3, k4, k5, k6, k7 = jax.random.split(key, 7)
    s_rnn = 1.0 / jnp.sqrt(hidden_dim)
    s_fc = 1.0 / jnp.sqrt(hidden_dim)
    return {
        "embedding": jax.random.normal(k1, (vocab_size, embed_dim), jnp.float32),
        "w_ih": jax.random.uniform(k2, (embed_dim, hidden_dim), jnp.float32,
                                   -s_rnn, s_rnn),
        "w_hh": jax.random.uniform(k3, (hidden_dim, hidden_dim), jnp.float32,
                                   -s_rnn, s_rnn),
        # combined RNN bias (b_ih + b_hh), kept 2-D (1, H) for TPU layout
        "b": (jax.random.uniform(k4, (1, hidden_dim), jnp.float32, -s_rnn, s_rnn)
              + jax.random.uniform(k5, (1, hidden_dim), jnp.float32, -s_rnn, s_rnn)),
        "w_fc": jax.random.uniform(k6, (hidden_dim, vocab_size), jnp.float32,
                                   -s_fc, s_fc),
        "b_fc": jax.random.uniform(k7, (1, vocab_size), jnp.float32, -s_fc, s_fc),
    }


def _reference_forward(text, params):
    """Pure-JAX reference (matches torch.nn.RNN semantics, h0 = 0)."""
    embedded = jnp.take(params["embedding"], text, axis=0)      # (B, T, E)
    B, T, E = embedded.shape
    H = params["w_hh"].shape[0]

    def step(h, x_t):
        h_new = jnp.tanh(x_t @ params["w_ih"] + h @ params["w_hh"] + params["b"])
        return h_new, h_new

    _, hs = jax.lax.scan(step, jnp.zeros((B, H), jnp.float32),
                         jnp.transpose(embedded, (1, 0, 2)))
    hs = jnp.transpose(hs, (1, 0, 2))                           # (B, T, H)
    return hs @ params["w_fc"] + params["b_fc"]


if __name__ == "__main__":
    vocab_size, embed_dim, hidden_dim = 64, 32, 32
    batch, seq = 2, 8

    key = jax.random.PRNGKey(0)
    pkey, tkey = jax.random.split(key)
    params = init_params(pkey, vocab_size, embed_dim, hidden_dim)
    text = jax.random.randint(tkey, (batch, seq), 0, vocab_size, dtype=jnp.int32)

    fwd = jax.jit(rnn_forward)
    out = jax.block_until_ready(fwd(text, params))
    ref = jax.block_until_ready(_reference_forward(text, params))

    assert out.shape == (batch, seq, vocab_size), out.shape
    assert jnp.allclose(out, ref, atol=1e-4, rtol=1e-4), "mismatch vs reference"
    print("KERNEL_OK")
</pallas_src>

<mosaic_0001>
module attributes {stable_mosaic.version = 11 : i64} {
  func.func @kernel(%arg0: i32, %arg1: memref<8x2x32xf32, #tpu.memory_space<vmem>>, %arg2: memref<32x32xf32, #tpu.memory_space<vmem>>, %arg3: memref<8x2x32xf32, #tpu.memory_space<vmem>>, %arg4: memref<2x32xf32, #tpu.memory_space<vmem>>) attributes {dimension_semantics = [#tpu.dimension_semantics<arbitrary>], iteration_bounds = array<i64: 1>, scalar_prefetch = 0 : i64, scratch_operands = 1 : i64, tpu.core_type = #tpu.core_type<tc>, window_params = [{transform_indices = @transform_0, window_bounds = array<i64: 8, 2, 32>}, {pipeline_mode = #tpu.pipeline_mode<synchronous>, transform_indices = @transform_1, window_bounds = array<i64: 32, 32>}, {transform_indices = @transform_2, window_bounds = array<i64: 8, 2, 32>}]} {
    %c0_i32 = arith.constant 0 : i32
    %0 = arith.cmpi eq, %arg0, %c0_i32 : i32
    %1 = arith.extui %0 : i1 to i32
    %c0_i32_0 = arith.constant 0 : i32
    %2 = arith.cmpi ne, %1, %c0_i32_0 : i32
    scf.if %2 {
      %cst_54 = arith.constant 0.000000e+00 : f32
      %70 = vector.broadcast %cst_54 : f32 to vector<2x32xf32>
      %c0_55 = arith.constant 0 : index
      %c0_56 = arith.constant 0 : index
      %71 = vector.load %arg4[%c0_55, %c0_56] : memref<2x32xf32, #tpu.memory_space<vmem>>, vector<2x32xf32>
      tpu.vector_store %arg4[%c0_55, %c0_56], %70 {strides = array<i32>} : memref<2x32xf32, #tpu.memory_space<vmem>>, vector<2x32xf32>,
    } else {
    }
    %c0 = arith.constant 0 : index
    %c0_1 = arith.constant 0 : index
    %3 = vector.load %arg4[%c0, %c0_1] : memref<2x32xf32, #tpu.memory_space<vmem>>, vector<2x32xf32>
    %c0_2 = arith.constant 0 : index
    %c0_3 = arith.constant 0 : index
    %4 = vector.load %arg2[%c0_2, %c0_3] : memref<32x32xf32, #tpu.memory_space<vmem>>, vector<32x32xf32>
    %c0_4 = arith.constant 0 : index
    %c0_5 = arith.constant 0 : index
    %c0_6 = arith.constant 0 : index
    %5 = vector.load %arg1[%c0_4, %c0_5, %c0_6] : memref<8x2x32xf32, #tpu.memory_space<vmem>>, vector<1x2x32xf32>
    %6 = vector.shape_cast %5 : vector<1x2x32xf32> to vector<2x32xf32>
    %cst = arith.constant dense<0.000000e+00> : vector<2x32xf32>
    %7 = tpu.matmul %3, %4, %cst {dimension_numbers = #tpu.dot_dimension_numbers<[1], [0], [0], [1], [0, 0, 1, 1], [], []>} : vector<2x32xf32>, vector<32x32xf32>, vector<2x32xf32> -> vector<2x32xf32>
    %8 = arith.addf %6, %7 : vector<2x32xf32>
    %9 = math.tanh %8 : vector<2x32xf32>
    %c0_7 = arith.constant 0 : index
    %c0_8 = arith.constant 0 : index
    %c0_9 = arith.constant 0 : index
    %10 = vector.load %arg3[%c0_7, %c0_8, %c0_9] : memref<8x2x32xf32, #tpu.memory_space<vmem>>, vector<1x2x32xf32>
    %11 = vector.shape_cast %10 : vector<1x2x32xf32> to vector<2x32xf32>
    %12 = vector.shape_cast %9 : vector<2x32xf32> to vector<1x2x32xf32>
    tpu.vector_store %arg3[%c0_7, %c0_8, %c0_9], %12 {strides = array<i32>} : memref<8x2x32xf32, #tpu.memory_space<vmem>>, vector<1x2x32xf32>,
    %c1 = arith.constant 1 : index
    %c0_10 = arith.constant 0 : index
    %c0_11 = arith.constant 0 : index
    %13 = vector.load %arg1[%c1, %c0_10, %c0_11] : memref<8x2x32xf32, #tpu.memory_space<vmem>>, vector<1x2x32xf32>
    %14 = vector.shape_cast %13 : vector<1x2x32xf32> to vector<2x32xf32>
    %cst_12 = arith.constant dense<0.000000e+00> : vector<2x32xf32>
    %15 = tpu.matmul %9, %4, %cst_12 {dimension_numbers = #tpu.dot_dimension_numbers<[1], [0], [0], [1], [0, 0, 1, 1], [], []>} : vector<2x32xf32>, vector<32x32xf32>, vector<2x32xf32> -> vector<2x32xf32>
    %16 = arith.addf %14, %15 : vector<2x32xf32>
    %17 = math.tanh %16 : vector<2x32xf32>
    %c1_13 = arith.constant 1 : index
    %c0_14 = arith.constant 0 : index
    %c0_15 = arith.constant 0 : index
    %18 = vector.load %arg3[%c1_13, %c0_14, %c0_15] : memref<8x2x32xf32, #tpu.memory_space<vmem>>, vector<1x2x32xf32>
    %19 = vector.shape_cast %18 : vector<1x2x32xf32> to vector<2x32xf32>
    %20 = vector.shape_cast %17 : vector<2x32xf32> to vector<1x2x32xf32>
    tpu.vector_store %arg3[%c1_13, %c0_14, %c0_15], %20 {strides = array<i32>} : memref<8x2x32xf32, #tpu.memory_space<vmem>>, vector<1x2x32xf32>,
    %c2 = arith.constant 2 : index
    %c0_16 = arith.constant 0 : index
    %c0_17 = arith.constant 0 : index
    %21 = vector.load %arg1[%c2, %c0_16, %c0_17] : memref<8x2x32xf32, #tpu.memory_space<vmem>>, vector<1x2x32xf32>
    %22 = vector.shape_cast %21 : vector<1x2x32xf32> to vector<2x32xf32>
    %cst_18 = arith.constant dense<0.000000e+00> : vector<2x32xf32>
    %23 = tpu.matmul %17, %4, %cst_18 {dimension_numbers = #tpu.dot_dimension_numbers<[1], [0], [0], [1], [0, 0, 1, 1], [], []>} : vector<2x32xf32>, vector<32x32xf32>, vector<2x32xf32> -> vector<2x32xf32>
    %24 = arith.addf %22, %23 : vector<2x32xf32>
    %25 = math.tanh %24 : vector<2x32xf32>
    %c2_19 = arith.constant 2 : index
    %c0_20 = arith.constant 0 : index
    %c0_21 = arith.constant 0 : index
    %26 = vector.load %arg3[%c2_19, %c0_20, %c0_21] : memref<8x2x32xf32, #tpu.memory_space<vmem>>, vector<1x2x32xf32>
    %27 = vector.shape_cast %26 : vector<1x2x32xf32> to vector<2x32xf32>
    %28 = vector.shape_cast %25 : vector<2x32xf32> to vector<1x2x32xf32>
    tpu.vector_store %arg3[%c2_19, %c0_20, %c0_21], %28 {strides = array<i32>} : memref<8x2x32xf32, #tpu.memory_space<vmem>>, vector<1x2x32xf32>,
    %c3 = arith.constant 3 : index
    %c0_22 = arith.constant 0 : index
    %c0_23 = arith.constant 0 : index
    %29 = vector.load %arg1[%c3, %c0_22, %c0_23] : memref<8x2x32xf32, #tpu.memory_space<vmem>>, vector<1x2x32xf32>
    %30 = vector.shape_cast %29 : vector<1x2x32xf32> to vector<2x32xf32>
    %cst_24 = arith.constant dense<0.000000e+00> : vector<2x32xf32>
    %31 = tpu.matmul %25, %4, %cst_24 {dimension_numbers = #tpu.dot_dimension_numbers<[1], [0], [0], [1], [0, 0, 1, 1], [], []>} : vector<2x32xf32>, vector<32x32xf32>, vector<2x32xf32> -> vector<2x32xf32>
    %32 = arith.addf %30, %31 : vector<2x32xf32>
    %33 = math.tanh %32 : vector<2x32xf32>
    %c3_25 = arith.constant 3 : index
    %c0_26 = arith.constant 0 : index
    %c0_27 = arith.constant 0 : index
    %34 = vector.load %arg3[%c3_25, %c0_26, %c0_27] : memref<8x2x32xf32, #tpu.memory_space<vmem>>, vector<1x2x32xf32>
    %35 = vector.shape_cast %34 : vector<1x2x32xf32> to vector<2x32xf32>
    %36 = vector.shape_cast %33 : vector<2x32xf32> to vector<1x2x32xf32>
    tpu.vector_store %arg3[%c3_25, %c0_26, %c0_27], %36 {strides = array<i32>} : memref<8x2x32xf32, #tpu.memory_space<vmem>>, vector<1x2x32xf32>,
    %c4 = arith.constant 4 : index
    %c0_28 = arith.constant 0 : index
    %c0_29 = arith.constant 0 : index
    %37 = vector.load %arg1[%c4, %c0_28, %c0_29] : memref<8x2x32xf32, #tpu.memory_space<vmem>>, vector<1x2x32xf32>
    %38 = vector.shape_cast %37 : vector<1x2x32xf32> to vector<2x32xf32>
    %cst_30 = arith.constant dense<0.000000e+00> : vector<2x32xf32>
    %39 = tpu.matmul %33, %4, %cst_30 {dimension_numbers = #tpu.dot_dimension_numbers<[1], [0], [0], [1], [0, 0, 1, 1], [], []>} : vector<2x32xf32>, vector<32x32xf32>, vector<2x32xf32> -> vector<2x32xf32>
    %40 = arith.addf %38, %39 : vector<2x32xf32>
    %41 = math.tanh %40 : vector<2x32xf32>
    %c4_31 = arith.constant 4 : index
    %c0_32 = arith.constant 0 : index
    %c0_33 = arith.constant 0 : index
    %42 = vector.load %arg3[%c4_31, %c0_32, %c0_33] : memref<8x2x32xf32, #tpu.memory_space<vmem>>, vector<1x2x32xf32>
    %43 = vector.shape_cast %42 : vector<1x2x32xf32> to vector<2x32xf32>
    %44 = vector.shape_cast %41 : vector<2x32xf32> to vector<1x2x32xf32>
    tpu.vector_store %arg3[%c4_31, %c0_32, %c0_33], %44 {strides = array<i32>} : memref<8x2x32xf32, #tpu.memory_space<vmem>>, vector<1x2x32xf32>,
    %c5 = arith.constant 5 : index
    %c0_34 = arith.constant 0 : index
    %c0_35 = arith.constant 0 : index
    %45 = vector.load %arg1[%c5, %c0_34, %c0_35] : memref<8x2x32xf32, #tpu.memory_space<vmem>>, vector<1x2x32xf32>
    %46 = vector.shape_cast %45 : vector<1x2x32xf32> to vector<2x32xf32>
    %cst_36 = arith.constant dense<0.000000e+00> : vector<2x32xf32>
    %47 = tpu.matmul %41, %4, %cst_36 {dimension_numbers = #tpu.dot_dimension_numbers<[1], [0], [0], [1], [0, 0, 1, 1], [], []>} : vector<2x32xf32>, vector<32x32xf32>, vector<2x32xf32> -> vector<2x32xf32>
    %48 = arith.addf %46, %47 : vector<2x32xf32>
    %49 = math.tanh %48 : vector<2x32xf32>
    %c5_37 = arith.constant 5 : index
    %c0_38 = arith.constant 0 : index
    %c0_39 = arith.constant 0 : index
    %50 = vector.load %arg3[%c5_37, %c0_38, %c0_39] : memref<8x2x32xf32, #tpu.memory_space<vmem>>, vector<1x2x32xf32>
    %51 = vector.shape_cast %50 : vector<1x2x32xf32> to vector<2x32xf32>
    %52 = vector.shape_cast %49 : vector<2x32xf32> to vector<1x2x32xf32>
    tpu.vector_store %arg3[%c5_37, %c0_38, %c0_39], %52 {strides = array<i32>} : memref<8x2x32xf32, #tpu.memory_space<vmem>>, vector<1x2x32xf32>,
    %c6 = arith.constant 6 : index
    %c0_40 = arith.constant 0 : index
    %c0_41 = arith.constant 0 : index
    %53 = vector.load %arg1[%c6, %c0_40, %c0_41] : memref<8x2x32xf32, #tpu.memory_space<vmem>>, vector<1x2x32xf32>
    %54 = vector.shape_cast %53 : vector<1x2x32xf32> to vector<2x32xf32>
    %cst_42 = arith.constant dense<0.000000e+00> : vector<2x32xf32>
    %55 = tpu.matmul %49, %4, %cst_42 {dimension_numbers = #tpu.dot_dimension_numbers<[1], [0], [0], [1], [0, 0, 1, 1], [], []>} : vector<2x32xf32>, vector<32x32xf32>, vector<2x32xf32> -> vector<2x32xf32>
    %56 = arith.addf %54, %55 : vector<2x32xf32>
    %57 = math.tanh %56 : vector<2x32xf32>
    %c6_43 = arith.constant 6 : index
    %c0_44 = arith.constant 0 : index
    %c0_45 = arith.constant 0 : index
    %58 = vector.load %arg3[%c6_43, %c0_44, %c0_45] : memref<8x2x32xf32, #tpu.memory_space<vmem>>, vector<1x2x32xf32>
    %59 = vector.shape_cast %58 : vector<1x2x32xf32> to vector<2x32xf32>
    %60 = vector.shape_cast %57 : vector<2x32xf32> to vector<1x2x32xf32>
    tpu.vector_store %arg3[%c6_43, %c0_44, %c0_45], %60 {strides = array<i32>} : memref<8x2x32xf32, #tpu.memory_space<vmem>>, vector<1x2x32xf32>,
    %c7 = arith.constant 7 : index
    %c0_46 = arith.constant 0 : index
    %c0_47 = arith.constant 0 : index
    %61 = vector.load %arg1[%c7, %c0_46, %c0_47] : memref<8x2x32xf32, #tpu.memory_space<vmem>>, vector<1x2x32xf32>
    %62 = vector.shape_cast %61 : vector<1x2x32xf32> to vector<2x32xf32>
    %cst_48 = arith.constant dense<0.000000e+00> : vector<2x32xf32>
    %63 = tpu.matmul %57, %4, %cst_48 {dimension_numbers = #tpu.dot_dimension_numbers<[1], [0], [0], [1], [0, 0, 1, 1], [], []>} : vector<2x32xf32>, vector<32x32xf32>, vector<2x32xf32> -> vector<2x32xf32>
    %64 = arith.addf %62, %63 : vector<2x32xf32>
    %65 = math.tanh %64 : vector<2x32xf32>
    %c7_49 = arith.constant 7 : index
    %c0_50 = arith.constant 0 : index
    %c0_51 = arith.constant 0 : index
    %66 = vector.load %arg3[%c7_49, %c0_50, %c0_51] : memref<8x2x32xf32, #tpu.memory_space<vmem>>, vector<1x2x32xf32>
    %67 = vector.shape_cast %66 : vector<1x2x32xf32> to vector<2x32xf32>
    %68 = vector.shape_cast %65 : vector<2x32xf32> to vector<1x2x32xf32>
    tpu.vector_store %arg3[%c7_49, %c0_50, %c0_51], %68 {strides = array<i32>} : memref<8x2x32xf32, #tpu.memory_space<vmem>>, vector<1x2x32xf32>,
    %c0_52 = arith.constant 0 : index
    %c0_53 = arith.constant 0 : index
    %69 = vector.load %arg4[%c0_52, %c0_53] : memref<2x32xf32, #tpu.memory_space<vmem>>, vector<2x32xf32>
    tpu.vector_store %arg4[%c0_52, %c0_53], %65 {strides = array<i32>} : memref<2x32xf32, #tpu.memory_space<vmem>>, vector<2x32xf32>,
    return
  }
  func.func @transform_0(%arg0: i32) -> (i32, i32, i32) {
    %c0_i32 = arith.constant 0 : i32
    %c0_i32_0 = arith.constant 0 : i32
    %c0_i32_1 = arith.constant 0 : i32
    return %arg0, %c0_i32, %c0_i32_0 : i32, i32, i32
  }
  func.func @transform_1(%arg0: i32) -> (i32, i32) {
    %c0_i32 = arith.constant 0 : i32
    %c0_i32_0 = arith.constant 0 : i32
    %c0_i32_1 = arith.constant 0 : i32
    return %c0_i32, %c0_i32_0 : i32, i32
  }
  func.func @transform_2(%arg0: i32) -> (i32, i32, i32) {
    %c0_i32 = arith.constant 0 : i32
    %c0_i32_0 = arith.constant 0 : i32
    %c0_i32_1 = arith.constant 0 : i32
    return %arg0, %c0_i32, %c0_i32_0 : i32, i32, i32
  }
}

</mosaic_0001>

<llo_original>
// kernel: rnn_forward.1
$region0: #{rnn_forward.1}
  #allocation0 [shape = 'u32[]', space=smem, size = 0x4, offset = 0x4, fixed_abs, tag = 'smem constant byte address 0x4 - core index']
  #allocation1 [shape = 'u32[144,128]{1,0:T(1,128)}', space=vmem, size = 0x12000, scoped, tag = 'internal scratch']
  #allocation2 [shape = 'f32[2,32]{1,0:T(2,128)}', space=vmem, size = 0x400, scoped, tag = 'scratch operand']
  %s0 = inlined_call_operand.vmem [shape: f32[8,2,32], index: 0, kind: input, shape index: {}]
  %s1 = inlined_call_operand.vmem [shape: f32[32,32], index: 1, kind: input, shape index: {}]
  %s2 = inlined_call_operand.vmem [shape: f32[8,2,32], index: 2, kind: output, shape index: {}]
  %s3 = sld [smem:[#allocation0]]
  $region22: #{rnn_forward.1} parent=0
    _
  %s5 = ssub.s32 1, %s3
  %s6 = scalar_select 0, %s5, %s3
  // Predicated region
  $region2: #{rnn_forward.1} parent=0 // pred_check
    _
  $region3: #{rnn_forward.1} parent=0 // pred_check_branch
    %8 = sbr.rel (0) target = $region5
  $region4: #{rnn_forward.1} parent=0 // pred_region
    _
  $region5: #{rnn_forward.1} parent=0 // pred_fallthru
    _
  // Predicated region
  $region6: #{rnn_forward.1} parent=0 // pred_check
    _
  $region7: #{rnn_forward.1} parent=0 // pred_check_branch
    %10 = sbr.rel (0) target = $region9
  $region8: #{rnn_forward.1} parent=0 // pred_region
    _
  $region9: #{rnn_forward.1} parent=0 // pred_fallthru
    _
  %p11 = scmp.eq.s32.totalorder 0, 0
  // Predicated region
  $region10: #{rnn_forward.1} parent=0 // pred_check
    %p12 = pneg %p11
  $region11: #{rnn_forward.1} parent=0 // pred_check_branch
    %14 = sbr.rel (%p12) target = $region13
  $region12: #{rnn_forward.1} parent=0 // pred_region
    %vm15 = vcmask 254976
    %16 = vst.msk [vmem:[#allocation2] sm:$0x3] %vm15, 0.0
  $region13: #{rnn_forward.1} parent=0 // pred_fallthru
    _
  %v17 = vld [vmem:[#allocation2] sm:$0x3]
  %v18 = vld [vmem:[%s1] sm:$0xff]
  %v19 = vld [vmem:[%s1 + $0x8] sm:$0xff]
  %v20 = vld [vmem:[%s1 + $0x10] sm:$0xff]
  %v21 = vld [vmem:[%s1 + $0x18] sm:$0xff]
  %v22 = vld [vmem:[%s0] sm:$0x3]
  %vm23 = vcmask 261120
  %v25 = vsel %vm23, %v17, 0
  %27 = vmatprep.subr.mxu0 0.0
  %28 = vmatpush1.msra.mxu0 %v18
  %29 = vmatprep.subr.mxu0 0.0
  %30 = vmatpush1.msra.mxu0 %v19
  %31 = vmatprep.subr.mxu0 0.0
  %32 = vmatpush1.msra.mxu0 %v20
  %33 = vmatprep.subr.mxu0 0.0
  %34 = vmatpush1.msra.mxu0 %v21
  %35 = vmatprep.subr.mxu0 0.0
  %36 = vmatpush1.msra.mxu0 0.0
  %37 = vmatprep.subr.mxu0 0.0
  %38 = vmatpush1.msra.mxu0 0.0
  %39 = vmatprep.subr.mxu0 0.0
  %40 = vmatpush1.msra.mxu0 0.0
  %41 = vmatprep.subr.mxu0 0.0
  %42 = vmatpush1.msra.mxu0 0.0
  %43 = vmatprep.subr.mxu0 0.0
  %44 = vmatpush1.msra.mxu0 0.0
  %45 = vmatprep.subr.mxu0 0.0
  %46 = vmatpush1.msra.mxu0 0.0
  %47 = vmatprep.subr.mxu0 0.0
  %48 = vmatpush1.msra.mxu0 0.0
  %49 = vmatprep.subr.mxu0 0.0
  %50 = vmatpush1.msra.mxu0 0.0
  %51 = vmatprep.subr.mxu0 0.0
  %52 = vmatpush1.msra.mxu0 0.0
  %53 = vmatprep.subr.mxu0 0.0
  %54 = vmatpush1.msra.mxu0 0.0
  %55 = vmatprep.subr.mxu0 0.0
  %56 = vmatpush1.msra.mxu0 0.0
  %57 = vmatprep.subr.mxu0 0.0
  %58 = vmatpush1.msra.mxu0 0.0
  %59 = vmatprep.subr.mxu0 0.0
  %60 = vmatpush1.msra.mxu0 0.0
  %61 = vmatprep.subr.mxu0 0.0
  %62 = vmatpush1.msra.mxu0 0.0
  %63 = vmatprep.subr.mxu0 0.0
  %64 = vmatpush1.msra.mxu0 0.0
  %65 = vmatprep.subr.mxu0 0.0
  %66 = vmatpush1.msra.mxu0 0.0
  %67 = vmatprep.subr.mxu0 0.0
  %68 = vmatpush1.msra.mxu0 0.0
  %69 = vmatprep.subr.mxu0 0.0
  %70 = vmatpush1.msra.mxu0 0.0
  %71 = vmatprep.subr.mxu0 0.0
  %72 = vmatpush1.msra.mxu0 0.0
  %73 = vmatprep.subr.mxu0 0.0
  %74 = vmatpush1.msra.mxu0 0.0
  %75 = vmatprep.subr.mxu0 0.0
  %76 = vmatpush1.msra.mxu0 0.0
  %77 = vmatprep.subr.mxu0 0.0
  %78 = vmatpush1.msra.mxu0 0.0
  %79 = vmatprep.subr.mxu0 0.0
  %80 = vmatpush1.msra.mxu0 0.0
  %81 = vmatprep.subr.mxu0 0.0
  %82 = vmatpush1.msra.mxu0 0.0
  %83 = vmatprep.subr.mxu0 0.0
  %84 = vmatpush1.msra.mxu0 0.0
  %85 = vmatprep.subr.mxu0 0.0
  %86 = vmatpush1.msra.mxu0 0.0
  %87 = vmatprep.subr.mxu0 0.0
  %88 = vmatpush1.msra.mxu0 0.0
  %89 = vmatprep.subr.mxu0 0.0
  %90 = vmatpush1.msra.mxu0 0.0
  %91 = vmatprep.mubr.f32.mxu0 0.0
  %92 = vmatmul.mubr.f32.gmra.mrb[0].mxu0 %v25
  %v93 = vpop.f32.mrb[0].mxu0
  %v94 = vadd.f32 0.0, %v93
  %v95 = vpop.f32.mrb[0].mxu0
  %96 = vdwg.mxu0
  %v97 = vadd.f32 %v22, %v94
  %v98 = vtanh.pop %v97
  %vm99 = vcmask 254976
  %100 = vst.msk [vmem:[%s2] sm:$0x3] %vm99, %v98
  %s101 = scalar_lea.vmem %s0, 2
  %v102 = vld [vmem:[%s101] sm:$0x3]
  %v104 = vsel %vm23, %v98, 0
  %106 = vmatprep.subr.mxu0 0.0
  %107 = vmatpush1.msra.mxu0 %v18
  %108 = vmatprep.subr.mxu0 0.0
  %109 = vmatpush1.msra.mxu0 %v19
  %110 = vmatprep.subr.mxu0 0.0
  %111 = vmatpush1.msra.mxu0 %v20
  %112 = vmatprep.subr.mxu0 0.0
  %113 = vmatpush1.msra.mxu0 %v21
  %114 = vmatprep.subr.mxu0 0.0
  %115 = vmatpush1.msra.mxu0 0.0
  %116 = vmatprep.subr.mxu0 0.0
  %117 = vmatpush1.msra.mxu0 0.0
  %118 = vmatprep.subr.mxu0 0.0
  %119 = vmatpush1.msra.mxu0 0.0
  %120 = vmatprep.subr.mxu0 0.0
  %121 = vmatpush1.msra.mxu0 0.0
  %122 = vmatprep.subr.mxu0 0.0
  %123 = vmatpush1.msra.mxu0 0.0
  %124 = vmatprep.subr.mxu0 0.0
  %125 = vmatpush1.msra.mxu0 0.0
  %126 = vmatprep.subr.mxu0 0.0
  %127 = vmatpush1.msra.mxu0 0.0
  %128 = vmatprep.subr.mxu0 0.0
  %129 = vmatpush1.msra.mxu0 0.0
  %130 = vmatprep.subr.mxu0 0.0
  %131 = vmatpush1.msra.mxu0 0.0
  %132 = vmatprep.subr.mxu0 0.0
  %133 = vmatpush1.msra.mxu0 0.0
  %134 = vmatprep.subr.mxu0 0.0
  %135 = vmatpush1.msra.mxu0 0.0
  %136 = vmatprep.subr.mxu0 0.0
  %137 = vmatpush1.msra.mxu0 0.0
  %138 = vmatprep.subr.mxu0 0.0
  %139 = vmatpush1.msra.mxu0 0.0
  %140 = vmatprep.subr.mxu0 0.0
  %141 = vmatpush1.msra.mxu0 0.0
  %142 = vmatprep.subr.mxu0 0.0
  %143 = vmatpush1.msra.mxu0 0.0
  %144 = vmatprep.subr.mxu0 0.0
  %145 = vmatpush1.msra.mxu0 0.0
  %146 = vmatprep.subr.mxu0 0.0
  %147 = vmatpush1.msra.mxu0 0.0
  %148 = vmatprep.subr.mxu0 0.0
  %149 = vmatpush1.msra.mxu0 0.0
  %150 = vmatprep.subr.mxu0 0.0
  %151 = vmatpush1.msra.mxu0 0.0
  %152 = vmatprep.subr.mxu0 0.0
  %153 = vmatpush1.msra.mxu0 0.0
  %154 = vmatprep.subr.mxu0 0.0
  %155 = vmatpush1.msra.mxu0 0.0
  %156 = vmatprep.subr.mxu0 0.0
  %157 = vmatpush1.msra.mxu0 0.0
  %158 = vmatprep.subr.mxu0 0.0
  %159 = vmatpush1.msra.mxu0 0.0
  %160 = vmatprep.subr.mxu0 0.0
  %161 = vmatpush1.msra.mxu0 0.0
  %162 = vmatprep.subr.mxu0 0.0
  %163 = vmatpush1.msra.mxu0 0.0
  %164 = vmatprep.subr.mxu0 0.0
  %165 = vmatpush1.msra.mxu0 0.0
  %166 = vmatprep.subr.mxu0 0.0
  %167 = vmatpush1.msra.mxu0 0.0
  %168 = vmatprep.subr.mxu0 0.0
  %169 = vmatpush1.msra.mxu0 0.0
  %170 = vmatprep.mubr.f32.mxu0 0.0
  %171 = vmatmul.mubr.f32.gmra.mrb[0].mxu0 %v104
  %v172 = vpop.f32.mrb[0].mxu0
  %v173 = vadd.f32 0.0, %v172
  %v174 = vpop.f32.mrb[0].mxu0
  %175 = vdwg.mxu0
  %v176 = vadd.f32 %v102, %v173
  %v177 = vtanh.pop %v176
  %s178 = scalar_lea.vmem %s2, 2
  %179 = vst.msk [vmem:[%s178] sm:$0x3] %vm99, %v177
  %s180 = scalar_lea.vmem %s0, 4
  %v181 = vld [vmem:[%s180] sm:$0x3]
  %v183 = vsel %vm23, %v177, 0
  %185 = vmatprep.subr.mxu0 0.0
  %186 = vmatpush1.msra.mxu0 %v18
  %187 = vmatprep.subr.mxu0 0.0
  %188 = vmatpush1.msra.mxu0 %v19
  %189 = vmatprep.subr.mxu0 0.0
  %190 = vmatpush1.msra.mxu0 %v20
  %191 = vmatprep.subr.mxu0 0.0
  %192 = vmatpush1.msra.mxu0 %v21
  %193 = vmatprep.subr.mxu0 0.0
  %194 = vmatpush1.msra.mxu0 0.0
  %195 = vmatprep.subr.mxu0 0.0
  %196 = vmatpush1.msra.mxu0 0.0
  %197 = vmatprep.subr.mxu0 0.0
  %198 = vmatpush1.msra.mxu0 0.0
  %199 = vmatprep.subr.mxu0 0.0
  %200 = vmatpush1.msra.mxu0 0.0
  %201 = vmatprep.subr.mxu0 0.0
  %202 = vmatpush1.msra.mxu0 0.0
  %203 = vmatprep.subr.mxu0 0.0
  %204 = vmatpush1.msra.mxu0 0.0
  %205 = vmatprep.subr.mxu0 0.0
  %206 = vmatpush1.msra.mxu0 0.0
  %207 = vmatprep.subr.mxu0 0.0
  %208 = vmatpush1.msra.mxu0 0.0
  %209 = vmatprep.subr.mxu0 0.0
  %210 = vmatpush1.msra.mxu0 0.0
  %211 = vmatprep.subr.mxu0 0.0
  %212 = vmatpush1.msra.mxu0 0.0
  %213 = vmatprep.subr.mxu0 0.0
  %214 = vmatpush1.msra.mxu0 0.0
  %215 = vmatprep.subr.mxu0 0.0
  %216 = vmatpush1.msra.mxu0 0.0
  %217 = vmatprep.subr.mxu0 0.0
  %218 = vmatpush1.msra.mxu0 0.0
  %219 = vmatprep.subr.mxu0 0.0
  %220 = vmatpush1.msra.mxu0 0.0
  %221 = vmatprep.subr.mxu0 0.0
  %222 = vmatpush1.msra.mxu0 0.0
  %223 = vmatprep.subr.mxu0 0.0
  %224 = vmatpush1.msra.mxu0 0.0
  %225 = vmatprep.subr.mxu0 0.0
  %226 = vmatpush1.msra.mxu0 0.0
  %227 = vmatprep.subr.mxu0 0.0
  %228 = vmatpush1.msra.mxu0 0.0
  %229 = vmatprep.subr.mxu0 0.0
  %230 = vmatpush1.msra.mxu0 0.0
  %231 = vmatprep.subr.mxu0 0.0
  %232 = vmatpush1.msra.mxu0 0.0
  %233 = vmatprep.subr.mxu0 0.0
  %234 = vmatpush1.msra.mxu0 0.0
  %235 = vmatprep.subr.mxu0 0.0
  %236 = vmatpush1.msra.mxu0 0.0
  %237 = vmatprep.subr.mxu0 0.0
  %238 = vmatpush1.msra.mxu0 0.0
  %239 = vmatprep.subr.mxu0 0.0
  %240 = vmatpush1.msra.mxu0 0.0
  %241 = vmatprep.subr.mxu0 0.0
  %242 = vmatpush1.msra.mxu0 0.0
  %243 = vmatprep.subr.mxu0 0.0
  %244 = vmatpush1.msra.mxu0 0.0
  %245 = vmatprep.subr.mxu0 0.0
  %246 = vmatpush1.msra.mxu0 0.0
  %247 = vmatprep.subr.mxu0 0.0
  %248 = vmatpush1.msra.mxu0 0.0
  %249 = vmatprep.mubr.f32.mxu0 0.0
  %250 = vmatmul.mubr.f32.gmra.mrb[0].mxu0 %v183
  %v251 = vpop.f32.mrb[0].mxu0
  %v252 = vadd.f32 0.0, %v251
  %v253 = vpop.f32.mrb[0].mxu0
  %254 = vdwg.mxu0
  %v255 = vadd.f32 %v181, %v252
  %v256 = vtanh.pop %v255
  %s257 = scalar_lea.vmem %s2, 4
  %258 = vst.msk [vmem:[%s257] sm:$0x3] %vm99, %v256
  %s259 = scalar_lea.vmem %s0, 6
  %v260 = vld [vmem:[%s259] sm:$0x3]
  %v262 = vsel %vm23, %v256, 0
  %264 = vmatprep.subr.mxu0 0.0
  %265 = vmatpush1.msra.mxu0 %v18
  %266 = vmatprep.subr.mxu0 0.0
  %267 = vmatpush1.msra.mxu0 %v19
  %268 = vmatprep.subr.mxu0 0.0
  %269 = vmatpush1.msra.mxu0 %v20
  %270 = vmatprep.subr.mxu0 0.0
  %271 = vmatpush1.msra.mxu0 %v21
  %272 = vmatprep.subr.mxu0 0.0
  %273 = vmatpush1.msra.mxu0 0.0
  %274 = vmatprep.subr.mxu0 0.0
  %275 = vmatpush1.msra.mxu0 0.0
  %276 = vmatprep.subr.mxu0 0.0
  %277 = vmatpush1.msra.mxu0 0.0
  %278 = vmatprep.subr.mxu0 0.0
  %279 = vmatpush1.msra.mxu0 0.0
  %280 = vmatprep.subr.mxu0 0.0
  %281 = vmatpush1.msra.mxu0 0.0
  %282 = vmatprep.subr.mxu0 0.0
  %283 = vmatpush1.msra.mxu0 0.0
  %284 = vmatprep.subr.mxu0 0.0
  %285 = vmatpush1.msra.mxu0 0.0
  %286 = vmatprep.subr.mxu0 0.0
  %287 = vmatpush1.msra.mxu0 0.0
  %288 = vmatprep.subr.mxu0 0.0
  %289 = vmatpush1.msra.mxu0 0.0
  %290 = vmatprep.subr.mxu0 0.0
  %291 = vmatpush1.msra.mxu0 0.0
  %292 = vmatprep.subr.mxu0 0.0
  %293 = vmatpush1.msra.mxu0 0.0
  %294 = vmatprep.subr.mxu0 0.0
  %295 = vmatpush1.msra.mxu0 0.0
  %296 = vmatprep.subr.mxu0 0.0
  %297 = vmatpush1.msra.mxu0 0.0
  %298 = vmatprep.subr.mxu0 0.0
  %299 = vmatpush1.msra.mxu0 0.0
  %300 = vmatprep.subr.mxu0 0.0
  %301 = vmatpush1.msra.mxu0 0.0
  %302 = vmatprep.subr.mxu0 0.0
  %303 = vmatpush1.msra.mxu0 0.0
  %304 = vmatprep.subr.mxu0 0.0
  %305 = vmatpush1.msra.mxu0 0.0
  %306 = vmatprep.subr.mxu0 0.0
  %307 = vmatpush1.msra.mxu0 0.0
  %308 = vmatprep.subr.mxu0 0.0
  %309 = vmatpush1.msra.mxu0 0.0
  %310 = vmatprep.subr.mxu0 0.0
  %311 = vmatpush1.msra.mxu0 0.0
  %312 = vmatprep.subr.mxu0 0.0
  %313 = vmatpush1.msra.mxu0 0.0
  %314 = vmatprep.subr.mxu0 0.0
  %315 = vmatpush1.msra.mxu0 0.0
  %316 = vmatprep.subr.mxu0 0.0
  %317 = vmatpush1.msra.mxu0 0.0
  %318 = vmatprep.subr.mxu0 0.0
  %319 = vmatpush1.msra.mxu0 0.0
  %320 = vmatprep.subr.mxu0 0.0
  %321 = vmatpush1.msra.mxu0 0.0
  %322 = vmatprep.subr.mxu0 0.0
  %323 = vmatpush1.msra.mxu0 0.0
  %324 = vmatprep.subr.mxu0 0.0
  %325 = vmatpush1.msra.mxu0 0.0
  %326 = vmatprep.subr.mxu0 0.0
  %327 = vmatpush1.msra.mxu0 0.0
  %328 = vmatprep.mubr.f32.mxu0 0.0
  %329 = vmatmul.mubr.f32.gmra.mrb[0].mxu0 %v262
  %v330 = vpop.f32.mrb[0].mxu0
  %v331 = vadd.f32 0.0, %v330
  %v332 = vpop.f32.mrb[0].mxu0
  %333 = vdwg.mxu0
  %v334 = vadd.f32 %v260, %v331
  %v335 = vtanh.pop %v334
  %s336 = scalar_lea.vmem %s2, 6
  %337 = vst.msk [vmem:[%s336] sm:$0x3] %vm99, %v335
  %s338 = scalar_lea.vmem %s0, 8
  %v339 = vld [vmem:[%s338] sm:$0x3]
  %v341 = vsel %vm23, %v335, 0
  %343 = vmatprep.subr.mxu0 0.0
  %344 = vmatpush1.msra.mxu0 %v18
  %345 = vmatprep.subr.mxu0 0.0
  %346 = vmatpush1.msra.mxu0 %v19
  %347 = vmatprep.subr.mxu0 0.0
  %348 = vmatpush1.msra.mxu0 %v20
  %349 = vmatprep.subr.mxu0 0.0
  %350 = vmatpush1.msra.mxu0 %v21
  %351 = vmatprep.subr.mxu0 0.0
  %352 = vmatpush1.msra.mxu0 0.0
  %353 = vmatprep.subr.mxu0 0.0
  %354 = vmatpush1.msra.mxu0 0.0
  %355 = vmatprep.subr.mxu0 0.0
  %356 = vmatpush1.msra.mxu0 0.0
  %357 = vmatprep.subr.mxu0 0.0
  %358 = vmatpush1.msra.mxu0 0.0
  %359 = vmatprep.subr.mxu0 0.0
  %360 = vmatpush1.msra.mxu0 0.0
  %361 = vmatprep.subr.mxu0 0.0
  %362 = vmatpush1.msra.mxu0 0.0
  %363 = vmatprep.subr.mxu0 0.0
  %364 = vmatpush1.msra.mxu0 0.0
  %365 = vmatprep.subr.mxu0 0.0
  %366 = vmatpush1.msra.mxu0 0.0
  %367 = vmatprep.subr.mxu0 0.0
  %368 = vmatpush1.msra.mxu0 0.0
  %369 = vmatprep.subr.mxu0 0.0
  %370 = vmatpush1.msra.mxu0 0.0
  %371 = vmatprep.subr.mxu0 0.0
  %372 = vmatpush1.msra.mxu0 0.0
  %373 = vmatprep.subr.mxu0 0.0
  %374 = vmatpush1.msra.mxu0 0.0
  %375 = vmatprep.subr.mxu0 0.0
  %376 = vmatpush1.msra.mxu0 0.0
  %377 = vmatprep.subr.mxu0 0.0
  %378 = vmatpush1.msra.mxu0 0.0
  %379 = vmatprep.subr.mxu0 0.0
  %380 = vmatpush1.msra.mxu0 0.0
  %381 = vmatprep.subr.mxu0 0.0
  %382 = vmatpush1.msra.mxu0 0.0
  %383 = vmatprep.subr.mxu0 0.0
  %384 = vmatpush1.msra.mxu0 0.0
  %385 = vmatprep.subr.mxu0 0.0
  %386 = vmatpush1.msra.mxu0 0.0
  %387 = vmatprep.subr.mxu0 0.0
  %388 = vmatpush1.msra.mxu0 0.0
  %389 = vmatprep.subr.mxu0 0.0
  %390 = vmatpush1.msra.mxu0 0.0
  %391 = vmatprep.subr.mxu0 0.0
  %392 = vmatpush1.msra.mxu0 0.0
  %393 = vmatprep.subr.mxu0 0.0
  %394 = vmatpush1.msra.mxu0 0.0
  %395 = vmatprep.subr.mxu0 0.0
  %396 = vmatpush1.msra.mxu0 0.0
  %397 = vmatprep.subr.mxu0 0.0
  %398 = vmatpush1.msra.mxu0 0.0
  %399 = vmatprep.subr.mxu0 0.0
  %400 = vmatpush1.msra.mxu0 0.0
  %401 = vmatprep.subr.mxu0 0.0
  %402 = vmatpush1.msra.mxu0 0.0
  %403 = vmatprep.subr.mxu0 0.0
  %404 = vmatpush1.msra.mxu0 0.0
  %405 = vmatprep.subr.mxu0 0.0
  %406 = vmatpush1.msra.mxu0 0.0
  %407 = vmatprep.mubr.f32.mxu0 0.0
  %408 = vmatmul.mubr.f32.gmra.mrb[0].mxu0 %v341
  %v409 = vpop.f32.mrb[0].mxu0
  %v410 = vadd.f32 0.0, %v409
  %v411 = vpop.f32.mrb[0].mxu0
  %412 = vdwg.mxu0
  %v413 = vadd.f32 %v339, %v410
  %v414 = vtanh.pop %v413
  %s415 = scalar_lea.vmem %s2, 8
  %416 = vst.msk [vmem:[%s415] sm:$0x3] %vm99, %v414
  %s417 = scalar_lea.vmem %s0, 10
  %v418 = vld [vmem:[%s417] sm:$0x3]
  %v420 = vsel %vm23, %v414, 0
  %422 = vmatprep.subr.mxu0 0.0
  %423 = vmatpush1.msra.mxu0 %v18
  %424 = vmatprep.subr.mxu0 0.0
  %425 = vmatpush1.msra.mxu0 %v19
  %426 = vmatprep.subr.mxu0 0.0
  %427 = vmatpush1.msra.mxu0 %v20
  %428 = vmatprep.subr.mxu0 0.0
  %429 = vmatpush1.msra.mxu0 %v21
  %430 = vmatprep.subr.mxu0 0.0
  %431 = vmatpush1.msra.mxu0 0.0
  %432 = vmatprep.subr.mxu0 0.0
  %433 = vmatpush1.msra.mxu0 0.0
  %434 = vmatprep.subr.mxu0 0.0
  %435 = vmatpush1.msra.mxu0 0.0
  %436 = vmatprep.subr.mxu0 0.0
  %437 = vmatpush1.msra.mxu0 0.0
  %438 = vmatprep.subr.mxu0 0.0
  %439 = vmatpush1.msra.mxu0 0.0
  %440 = vmatprep.subr.mxu0 0.0
  %441 = vmatpush1.msra.mxu0 0.0
  %442 = vmatprep.subr.mxu0 0.0
  %443 = vmatpush1.msra.mxu0 0.0
  %444 = vmatprep.subr.mxu0 0.0
  %445 = vmatpush1.msra.mxu0 0.0
  %446 = vmatprep.subr.mxu0 0.0
  %447 = vmatpush1.msra.mxu0 0.0
  %448 = vmatprep.subr.mxu0 0.0
  %449 = vmatpush1.msra.mxu0 0.0
  %450 = vmatprep.subr.mxu0 0.0
  %451 = vmatpush1.msra.mxu0 0.0
  %452 = vmatprep.subr.mxu0 0.0
  %453 = vmatpush1.msra.mxu0 0.0
  %454 = vmatprep.subr.mxu0 0.0
  %455 = vmatpush1.msra.mxu0 0.0
  %456 = vmatprep.subr.mxu0 0.0
  %457 = vmatpush1.msra.mxu0 0.0
  %458 = vmatprep.subr.mxu0 0.0
  %459 = vmatpush1.msra.mxu0 0.0
  %460 = vmatprep.subr.mxu0 0.0
  %461 = vmatpush1.msra.mxu0 0.0
  %462 = vmatprep.subr.mxu0 0.0
  %463 = vmatpush1.msra.mxu0 0.0
  %464 = vmatprep.subr.mxu0 0.0
  %465 = vmatpush1.msra.mxu0 0.0
  %466 = vmatprep.subr.mxu0 0.0
  %467 = vmatpush1.msra.mxu0 0.0
  %468 = vmatprep.subr.mxu0 0.0
  %469 = vmatpush1.msra.mxu0 0.0
  %470 = vmatprep.subr.mxu0 0.0
  %471 = vmatpush1.msra.mxu0 0.0
  %472 = vmatprep.subr.mxu0 0.0
  %473 = vmatpush1.msra.mxu0 0.0
  %474 = vmatprep.subr.mxu0 0.0
  %475 = vmatpush1.msra.mxu0 0.0
  %476 = vmatprep.subr.mxu0 0.0
  %477 = vmatpush1.msra.mxu0 0.0
  %478 = vmatprep.subr.mxu0 0.0
  %479 = vmatpush1.msra.mxu0 0.0
  %480 = vmatprep.subr.mxu0 0.0
  %481 = vmatpush1.msra.mxu0 0.0
  %482 = vmatprep.subr.mxu0 0.0
  %483 = vmatpush1.msra.mxu0 0.0
  %484 = vmatprep.subr.mxu0 0.0
  %485 = vmatpush1.msra.mxu0 0.0
  %486 = vmatprep.mubr.f32.mxu0 0.0
  %487 = vmatmul.mubr.f32.gmra.mrb[0].mxu0 %v420
  %v488 = vpop.f32.mrb[0].mxu0
  %v489 = vadd.f32 0.0, %v488
  %v490 = vpop.f32.mrb[0].mxu0
  %491 = vdwg.mxu0
  %v492 = vadd.f32 %v418, %v489
  %v493 = vtanh.pop %v492
  %s494 = scalar_lea.vmem %s2, 10
  %495 = vst.msk [vmem:[%s494] sm:$0x3] %vm99, %v493
  %s496 = scalar_lea.vmem %s0, 12
  %v497 = vld [vmem:[%s496] sm:$0x3]
  %v499 = vsel %vm23, %v493, 0
  %501 = vmatprep.subr.mxu0 0.0
  %502 = vmatpush1.msra.mxu0 %v18
  %503 = vmatprep.subr.mxu0 0.0
  %504 = vmatpush1.msra.mxu0 %v19
  %505 = vmatprep.subr.mxu0 0.0
  %506 = vmatpush1.msra.mxu0 %v20
  %507 = vmatprep.subr.mxu0 0.0
  %508 = vmatpush1.msra.mxu0 %v21
  %509 = vmatprep.subr.mxu0 0.0
  %510 = vmatpush1.msra.mxu0 0.0
  %511 = vmatprep.subr.mxu0 0.0
  %512 = vmatpush1.msra.mxu0 0.0
  %513 = vmatprep.subr.mxu0 0.0
  %514 = vmatpush1.msra.mxu0 0.0
  %515 = vmatprep.subr.mxu0 0.0
  %516 = vmatpush1.msra.mxu0 0.0
  %517 = vmatprep.subr.mxu0 0.0
  %518 = vmatpush1.msra.mxu0 0.0
  %519 = vmatprep.subr.mxu0 0.0
  %520 = vmatpush1.msra.mxu0 0.0
  %521 = vmatprep.subr.mxu0 0.0
  %522 = vmatpush1.msra.mxu0 0.0
  %523 = vmatprep.subr.mxu0 0.0
  %524 = vmatpush1.msra.mxu0 0.0
  %525 = vmatprep.subr.mxu0 0.0
  %526 = vmatpush1.msra.mxu0 0.0
  %527 = vmatprep.subr.mxu0 0.0
  %528 = vmatpush1.msra.mxu0 0.0
  %529 = vmatprep.subr.mxu0 0.0
  %530 = vmatpush1.msra.mxu0 0.0
  %531 = vmatprep.subr.mxu0 0.0
  %532 = vmatpush1.msra.mxu0 0.0
  %533 = vmatprep.subr.mxu0 0.0
  %534 = vmatpush1.msra.mxu0 0.0
  %535 = vmatprep.subr.mxu0 0.0
  %536 = vmatpush1.msra.mxu0 0.0
  %537 = vmatprep.subr.mxu0 0.0
  %538 = vmatpush1.msra.mxu0 0.0
  %539 = vmatprep.subr.mxu0 0.0
  %540 = vmatpush1.msra.mxu0 0.0
  %541 = vmatprep.subr.mxu0 0.0
  %542 = vmatpush1.msra.mxu0 0.0
  %543 = vmatprep.subr.mxu0 0.0
  %544 = vmatpush1.msra.mxu0 0.0
  %545 = vmatprep.subr.mxu0 0.0
  %546 = vmatpush1.msra.mxu0 0.0
  %547 = vmatprep.subr.mxu0 0.0
  %548 = vmatpush1.msra.mxu0 0.0
  %549 = vmatprep.subr.mxu0 0.0
  %550 = vmatpush1.msra.mxu0 0.0
  %551 = vmatprep.subr.mxu0 0.0
  %552 = vmatpush1.msra.mxu0 0.0
  %553 = vmatprep.subr.mxu0 0.0
  %554 = vmatpush1.msra.mxu0 0.0
  %555 = vmatprep.subr.mxu0 0.0
  %556 = vmatpush1.msra.mxu0 0.0
  %557 = vmatprep.subr.mxu0 0.0
  %558 = vmatpush1.msra.mxu0 0.0
  %559 = vmatprep.subr.mxu0 0.0
  %560 = vmatpush1.msra.mxu0 0.0
  %561 = vmatprep.subr.mxu0 0.0
  %562 = vmatpush1.msra.mxu0 0.0
  %563 = vmatprep.subr.mxu0 0.0
  %564 = vmatpush1.msra.mxu0 0.0
  %565 = vmatprep.mubr.f32.mxu0 0.0
  %566 = vmatmul.mubr.f32.gmra.mrb[0].mxu0 %v499
  %v567 = vpop.f32.mrb[0].mxu0
  %v568 = vadd.f32 0.0, %v567
  %v569 = vpop.f32.mrb[0].mxu0
  %570 = vdwg.mxu0
  %v571 = vadd.f32 %v497, %v568
  %v572 = vtanh.pop %v571
  %s573 = scalar_lea.vmem %s2, 12
  %574 = vst.msk [vmem:[%s573] sm:$0x3] %vm99, %v572
  %s575 = scalar_lea.vmem %s0, 14
  %v576 = vld [vmem:[%s575] sm:$0x3]
  %v578 = vsel %vm23, %v572, 0
  %580 = vmatprep.subr.mxu0 0.0
  %581 = vmatpush1.msra.mxu0 %v18
  %582 = vmatprep.subr.mxu0 0.0
  %583 = vmatpush1.msra.mxu0 %v19
  %584 = vmatprep.subr.mxu0 0.0
  %585 = vmatpush1.msra.mxu0 %v20
  %586 = vmatprep.subr.mxu0 0.0
  %587 = vmatpush1.msra.mxu0 %v21
  %588 = vmatprep.subr.mxu0 0.0
  %589 = vmatpush1.msra.mxu0 0.0
  %590 = vmatprep.subr.mxu0 0.0
  %591 = vmatpush1.msra.mxu0 0.0
  %592 = vmatprep.subr.mxu0 0.0
  %593 = vmatpush1.msra.mxu0 0.0
  %594 = vmatprep.subr.mxu0 0.0
  %595 = vmatpush1.msra.mxu0 0.0
  %596 = vmatprep.subr.mxu0 0.0
  %597 = vmatpush1.msra.mxu0 0.0
  %598 = vmatprep.subr.mxu0 0.0
  %599 = vmatpush1.msra.mxu0 0.0
  %600 = vmatprep.subr.mxu0 0.0
  %601 = vmatpush1.msra.mxu0 0.0
  %602 = vmatprep.subr.mxu0 0.0
  %603 = vmatpush1.msra.mxu0 0.0
  %604 = vmatprep.subr.mxu0 0.0
  %605 = vmatpush1.msra.mxu0 0.0
  %606 = vmatprep.subr.mxu0 0.0
  %607 = vmatpush1.msra.mxu0 0.0
  %608 = vmatprep.subr.mxu0 0.0
  %609 = vmatpush1.msra.mxu0 0.0
  %610 = vmatprep.subr.mxu0 0.0
  %611 = vmatpush1.msra.mxu0 0.0
  %612 = vmatprep.subr.mxu0 0.0
  %613 = vmatpush1.msra.mxu0 0.0
  %614 = vmatprep.subr.mxu0 0.0
  %615 = vmatpush1.msra.mxu0 0.0
  %616 = vmatprep.subr.mxu0 0.0
  %617 = vmatpush1.msra.mxu0 0.0
  %618 = vmatprep.subr.mxu0 0.0
  %619 = vmatpush1.msra.mxu0 0.0
  %620 = vmatprep.subr.mxu0 0.0
  %621 = vmatpush1.msra.mxu0 0.0
  %622 = vmatprep.subr.mxu0 0.0
  %623 = vmatpush1.msra.mxu0 0.0
  %624 = vmatprep.subr.mxu0 0.0
  %625 = vmatpush1.msra.mxu0 0.0
  %626 = vmatprep.subr.mxu0 0.0
  %627 = vmatpush1.msra.mxu0 0.0
  %628 = vmatprep.subr.mxu0 0.0
  %629 = vmatpush1.msra.mxu0 0.0
  %630 = vmatprep.subr.mxu0 0.0
  %631 = vmatpush1.msra.mxu0 0.0
  %632 = vmatprep.subr.mxu0 0.0
  %633 = vmatpush1.msra.mxu0 0.0
  %634 = vmatprep.subr.mxu0 0.0
  %635 = vmatpush1.msra.mxu0 0.0
  %636 = vmatprep.subr.mxu0 0.0
  %637 = vmatpush1.msra.mxu0 0.0
  %638 = vmatprep.subr.mxu0 0.0
  %639 = vmatpush1.msra.mxu0 0.0
  %640 = vmatprep.subr.mxu0 0.0
  %641 = vmatpush1.msra.mxu0 0.0
  %642 = vmatprep.subr.mxu0 0.0
  %643 = vmatpush1.msra.mxu0 0.0
  %644 = vmatprep.mubr.f32.mxu0 0.0
  %645 = vmatmul.mubr.f32.gmra.mrb[0].mxu0 %v578
  %v646 = vpop.f32.mrb[0].mxu0
  %v647 = vadd.f32 0.0, %v646
  %v648 = vpop.f32.mrb[0].mxu0
  %649 = vdwg.mxu0
  %v650 = vadd.f32 %v576, %v647
  %v651 = vtanh.pop %v650
  %s652 = scalar_lea.vmem %s2, 14
  %653 = vst.msk [vmem:[%s652] sm:$0x3] %vm99, %v651
  %654 = vst.msk [vmem:[#allocation2] sm:$0x3] %vm99, %v651
  // Predicated region
  $region14: #{rnn_forward.1} parent=0 // pred_check
    _
  $region15: #{rnn_forward.1} parent=0 // pred_check_branch
    %656 = sbr.rel (0) target = $region17
  $region16: #{rnn_forward.1} parent=0 // pred_region
    _
  $region17: #{rnn_forward.1} parent=0 // pred_fallthru
    _
  // Predicated region
  $region18: #{rnn_forward.1} parent=0 // pred_check
    _
  $region19: #{rnn_forward.1} parent=0 // pred_check_branch
    %658 = sbr.rel (0) target = $region21
  $region20: #{rnn_forward.1} parent=0 // pred_region
    _
  $region21: #{rnn_forward.1} parent=0 // pred_fallthru
    _

</llo_original>
